<compile_context>
chip_gen: v6e
topology: v6e:2x2x1
jax: 0.10.0
libtpu: 0.0.40
codegen_flags: <defaults>
</compile_context>

<pallas_src>
import jax
import jax.numpy as jnp
from jax.experimental import pallas as pl
from jax.experimental.pallas import tpu as pltpu


def rnn_kernel(x_ref, w1_ref, w2_ref, out_ref):
    """One batch-chunk, whole sequence; recurrence statically unrolled."""
    T, Bb, IN = x_ref.shape                 # time-major input chunk
    W1_rows, K = w1_ref.shape
    M = w2_ref.shape[1]

    # Static slices of the packed parameter slabs (loaded once per chunk).
    wih = w1_ref[0:IN, :]                   # (IN, K)   == W_ih^T
    bh = w1_ref[IN:IN + 1, :]               # (1, K)    fused b_ih + b_hh (f32)
    whh = w1_ref[W1_rows - K:, :]           # (K, K)    == W_hh^T (8-row aligned)
    vw = w2_ref[0:K, :]                     # (K, M)    == V_W^T
    vb = w2_ref[K:, :]                      # (1, M)

    whh_bf = whh.astype(jnp.bfloat16)       # hoisted: cast the weight once

    # Input projection (+ fused bias) for ALL timesteps in one MXU pass, off
    # the serial chain.  Rows [t*Bb, (t+1)*Bb) are timestep t, sublane-aligned
    # because Bb is a multiple of 8 and everything in VMEM is f32.
    x_all = x_ref[...].reshape(T * Bb, IN)
    pre_x = (jnp.dot(x_all.astype(jnp.bfloat16), wih.astype(jnp.bfloat16),
                     preferred_element_type=jnp.float32)
             + bh)                          # (T*Bb, K) f32

    # Serial recurrence: one bf16 (Bb,K)@(K,K) MXU pass + f32 add/tanh per
    # step.  States stay in vregs (no scratch store/reload).
    state = jnp.zeros((Bb, K), jnp.float32)
    states = []
    for t in range(T):                      # T is small and compile-time const
        h = pre_x[t * Bb:(t + 1) * Bb, :] + jnp.dot(
            state.astype(jnp.bfloat16), whh_bf,
            preferred_element_type=jnp.float32)
        state = jnp.tanh(h)
        states.append(state)

    # Output projection for ALL timesteps in one MXU pass + one slab store.
    all_states = jnp.concatenate(states, axis=0)            # (T*Bb, K), f32
    out = (jnp.dot(all_states.astype(jnp.bfloat16), vw.astype(jnp.bfloat16),
                   preferred_element_type=jnp.float32)
           + vb)                                            # (T*Bb, M)
    out_ref[...] = out.reshape(T, Bb, M)


def _pick_batch_block(B):
    """Batch chunk size: shard across (up to) v7x's 2 TensorCores while keeping
    each chunk a multiple of the 8-row sublane tile.  No-op on v5e/v6e."""
    if B % 16 == 0:
        return B // 2
    return B


def rnn_forward(inputs, w_ih, w_hh, b_ih, b_hh, v_w, v_b):
    """inputs: (B, T, m+1) float32 (PyTorch layout).  Returns (B, T, m)."""
    B, T, IN = inputs.shape
    K = w_ih.shape[0]            # hidden size (PyTorch W_ih is (k, m+1))
    M = v_w.shape[0]             # output size (PyTorch V.weight is (m, k))

    # Time-major for the kernel; transpose fuses in XLA outside the kernel.
    x_tm = jnp.transpose(inputs, (1, 0, 2)).astype(jnp.float32)   # (T, B, IN)

    # Pack the 6 tiny parameter arrays into 2 slabs -> 3 input DMAs total.
    # W_hh^T is padded up to an 8-row boundary so its in-kernel slice is
    # sublane-tile aligned.
    whh_row = -(-(IN + 1) // 8) * 8
    pad_rows = whh_row - (IN + 1)
    w1 = jnp.concatenate([
        jnp.transpose(w_ih).astype(jnp.float32),                  # (IN, K)
        (b_ih + b_hh).reshape(1, K).astype(jnp.float32),          # fused bias
        jnp.zeros((pad_rows, K), jnp.float32),                    # alignment pad
        jnp.transpose(w_hh).astype(jnp.float32),                  # (K, K)
    ], axis=0)                                                    # (whh_row+K, K)
    w2 = jnp.concatenate([
        jnp.transpose(v_w).astype(jnp.float32),                   # (K, M)
        v_b.reshape(1, M).astype(jnp.float32),                    # (1, M)
    ], axis=0)                                                    # (K+1, M)

    bb = _pick_batch_block(B)
    nb = B // bb

    cost = pl.CostEstimate(
        flops=2 * T * B * (IN * K + K * K + K * M),
        transcendentals=T * B * K,
        bytes_accessed=4 * (x_tm.size + w1.size + w2.size + T * B * M))

    out_tm = pl.pallas_call(
        rnn_kernel,
        out_shape=jax.ShapeDtypeStruct((T, B, M), jnp.float32),
        grid=(nb,),
        in_specs=[
            pl.BlockSpec((T, bb, IN), lambda b: (0, b, 0)),
            pl.BlockSpec(w1.shape, lambda b: (0, 0)),   # resident across grid
            pl.BlockSpec(w2.shape, lambda b: (0, 0)),   # resident across grid
        ],
        out_specs=pl.BlockSpec((T, bb, M), lambda b: (0, b, 0)),
        compiler_params=pltpu.CompilerParams(
            dimension_semantics=("parallel",)),
        cost_estimate=cost,
    )(x_tm, w1, w2)

    return jnp.transpose(out_tm, (1, 0, 2))              # back to (B, T, M)


def rnn_forward_ref(inputs, w_ih, w_hh, b_ih, b_hh, v_w, v_b):
    """Pure-JAX f32 reference mirroring the PyTorch forward."""
    B, T, _ = inputs.shape
    K = w_ih.shape[0]
    state = jnp.zeros((B, K), jnp.float32)
    outs = []
    for t in range(T):
        x_t = inputs[:, t, :]
        state = jnp.tanh(x_t @ w_ih.T + b_ih + state @ w_hh.T + b_hh)
        outs.append(state @ v_w.T + v_b)
    return jnp.stack(outs, axis=1)


if __name__ == "__main__":
    # Copy-task shapes: alphabet m=9 (loss uses view(-1, 9)), input dim m+1=10,
    # hidden k=32, batch_size=32 (from the module), seq length T=8.
    m, k = 9, 32
    B, T = 32, 8
    IN = m + 1

    key = jax.random.PRNGKey(0)
    ks = jax.random.split(key, 8)
    bound = 1.0 / jnp.sqrt(jnp.float32(k))   # PyTorch RNNCell / Linear init range

    w_ih = jax.random.uniform(ks[0], (k, IN), jnp.float32, -bound, bound)
    w_hh = jax.random.uniform(ks[1], (k, k), jnp.float32, -bound, bound)
    b_ih = jax.random.uniform(ks[2], (k,), jnp.float32, -bound, bound)
    b_hh = jax.random.uniform(ks[3], (k,), jnp.float32, -bound, bound)
    v_w = jax.random.uniform(ks[4], (m, k), jnp.float32, -bound, bound)
    v_b = jax.random.uniform(ks[5], (m,), jnp.float32, -bound, bound)

    inputs = jax.random.normal(ks[6], (B, T, IN), jnp.float32)

    out = rnn_forward(inputs, w_ih, w_hh, b_ih, b_hh, v_w, v_b)
    out = jax.block_until_ready(out)

    ref = rnn_forward_ref(inputs, w_ih, w_hh, b_ih, b_hh, v_w, v_b)
    assert out.shape == (B, T, m)
    # Tolerance loosened vs the f32 reference because the MXU operands are
    # bf16 (accumulation and all VPU/EUP work stays f32); observed error is
    # O(1e-3), 3e-2 gives comfortable margin.
    assert jnp.allclose(out, ref, atol=3e-2, rtol=3e-2)

    print("KERNEL_OK")
</pallas_src>

<mosaic_0001>
module attributes {stable_mosaic.version = 11 : i64} {
  func.func @rnn_kernel(%arg0: i32, %arg1: memref<8x16x10xf32, #tpu.memory_space<vmem>>, %arg2: memref<48x32xf32, #tpu.memory_space<vmem>>, %arg3: memref<33x9xf32, #tpu.memory_space<vmem>>, %arg4: memref<8x16x9xf32, #tpu.memory_space<vmem>>) attributes {dimension_semantics = [#tpu.dimension_semantics<parallel>], iteration_bounds = array<i64: 2>, scalar_prefetch = 0 : i64, scratch_operands = 0 : i64, tpu.core_type = #tpu.core_type<tc>, window_params = [{transform_indices = @transform_0, window_bounds = array<i64: 8, 16, 10>}, {pipeline_mode = #tpu.pipeline_mode<synchronous>, transform_indices = @transform_1, window_bounds = array<i64: 48, 32>}, {pipeline_mode = #tpu.pipeline_mode<synchronous>, transform_indices = @transform_2, window_bounds = array<i64: 33, 9>}, {transform_indices = @transform_3, window_bounds = array<i64: 8, 16, 9>}]} {
    %c0 = arith.constant 0 : index
    %c0_0 = arith.constant 0 : index
    %0 = vector.load %arg2[%c0, %c0_0] : memref<48x32xf32, #tpu.memory_space<vmem>>, vector<10x32xf32>
    %c10 = arith.constant 10 : index
    %c0_1 = arith.constant 0 : index
    %1 = vector.load %arg2[%c10, %c0_1] : memref<48x32xf32, #tpu.memory_space<vmem>>, vector<1x32xf32>
    %c16 = arith.constant 16 : index
    %c0_2 = arith.constant 0 : index
    %2 = vector.load %arg2[%c16, %c0_2] : memref<48x32xf32, #tpu.memory_space<vmem>>, vector<32x32xf32>
    %c0_3 = arith.constant 0 : index
    %c0_4 = arith.constant 0 : index
    %3 = vector.load %arg3[%c0_3, %c0_4] : memref<33x9xf32, #tpu.memory_space<vmem>>, vector<32x9xf32>
    %c32 = arith.constant 32 : index
    %c0_5 = arith.constant 0 : index
    %4 = vector.load %arg3[%c32, %c0_5] : memref<33x9xf32, #tpu.memory_space<vmem>>, vector<1x9xf32>
    %5 = arith.truncf %2 : vector<32x32xf32> to vector<32x32xbf16>
    %c0_6 = arith.constant 0 : index
    %c0_7 = arith.constant 0 : index
    %c0_8 = arith.constant 0 : index
    %6 = vector.load %arg1[%c0_6, %c0_7, %c0_8] : memref<8x16x10xf32, #tpu.memory_space<vmem>>, vector<8x16x10xf32>
    %7 = vector.shape_cast %6 : vector<8x16x10xf32> to vector<128x10xf32>
    %8 = arith.truncf %7 : vector<128x10xf32> to vector<128x10xbf16>
    %9 = arith.truncf %0 : vector<10x32xf32> to vector<10x32xbf16>
    %cst = arith.constant dense<0.000000e+00> : vector<128x32xf32>
    %10 = tpu.matmul %8, %9, %cst {dimension_numbers = #tpu.dot_dimension_numbers<[1], [0], [0], [1], [0, 0, 1, 1], [], []>} : vector<128x10xbf16>, vector<10x32xbf16>, vector<128x32xf32> -> vector<128x32xf32>
    %11 = vector.broadcast %1 : vector<1x32xf32> to vector<128x32xf32>
    %12 = arith.addf %10, %11 : vector<128x32xf32>
    %cst_9 = arith.constant 0.000000e+00 : f32
    %13 = vector.broadcast %cst_9 : f32 to vector<16x32xf32>
    %14 = vector.extract_strided_slice %12 {offsets = [0, 0], sizes = [16, 32], strides = [1, 1]} : vector<128x32xf32> to vector<16x32xf32>
    %15 = arith.truncf %13 : vector<16x32xf32> to vector<16x32xbf16>
    %cst_10 = arith.constant dense<0.000000e+00> : vector<16x32xf32>
    %16 = tpu.matmul %15, %5, %cst_10 {dimension_numbers = #tpu.dot_dimension_numbers<[1], [0], [0], [1], [0, 0, 1, 1], [], []>} : vector<16x32xbf16>, vector<32x32xbf16>, vector<16x32xf32> -> vector<16x32xf32>
    %17 = arith.addf %14, %16 : vector<16x32xf32>
    %18 = math.tanh %17 : vector<16x32xf32>
    %19 = vector.extract_strided_slice %12 {offsets = [16, 0], sizes = [16, 32], strides = [1, 1]} : vector<128x32xf32> to vector<16x32xf32>
    %20 = arith.truncf %18 : vector<16x32xf32> to vector<16x32xbf16>
    %cst_11 = arith.constant dense<0.000000e+00> : vector<16x32xf32>
    %21 = tpu.matmul %20, %5, %cst_11 {dimension_numbers = #tpu.dot_dimension_numbers<[1], [0], [0], [1], [0, 0, 1, 1], [], []>} : vector<16x32xbf16>, vector<32x32xbf16>, vector<16x32xf32> -> vector<16x32xf32>
    %22 = arith.addf %19, %21 : vector<16x32xf32>
    %23 = math.tanh %22 : vector<16x32xf32>
    %24 = vector.extract_strided_slice %12 {offsets = [32, 0], sizes = [16, 32], strides = [1, 1]} : vector<128x32xf32> to vector<16x32xf32>
    %25 = arith.truncf %23 : vector<16x32xf32> to vector<16x32xbf16>
    %cst_12 = arith.constant dense<0.000000e+00> : vector<16x32xf32>
    %26 = tpu.matmul %25, %5, %cst_12 {dimension_numbers = #tpu.dot_dimension_numbers<[1], [0], [0], [1], [0, 0, 1, 1], [], []>} : vector<16x32xbf16>, vector<32x32xbf16>, vector<16x32xf32> -> vector<16x32xf32>
    %27 = arith.addf %24, %26 : vector<16x32xf32>
    %28 = math.tanh %27 : vector<16x32xf32>
    %29 = vector.extract_strided_slice %12 {offsets = [48, 0], sizes = [16, 32], strides = [1, 1]} : vector<128x32xf32> to vector<16x32xf32>
    %30 = arith.truncf %28 : vector<16x32xf32> to vector<16x32xbf16>
    %cst_13 = arith.constant dense<0.000000e+00> : vector<16x32xf32>
    %31 = tpu.matmul %30, %5, %cst_13 {dimension_numbers = #tpu.dot_dimension_numbers<[1], [0], [0], [1], [0, 0, 1, 1], [], []>} : vector<16x32xbf16>, vector<32x32xbf16>, vector<16x32xf32> -> vector<16x32xf32>
    %32 = arith.addf %29, %31 : vector<16x32xf32>
    %33 = math.tanh %32 : vector<16x32xf32>
    %34 = vector.extract_strided_slice %12 {offsets = [64, 0], sizes = [16, 32], strides = [1, 1]} : vector<128x32xf32> to vector<16x32xf32>
    %35 = arith.truncf %33 : vector<16x32xf32> to vector<16x32xbf16>
    %cst_14 = arith.constant dense<0.000000e+00> : vector<16x32xf32>
    %36 = tpu.matmul %35, %5, %cst_14 {dimension_numbers = #tpu.dot_dimension_numbers<[1], [0], [0], [1], [0, 0, 1, 1], [], []>} : vector<16x32xbf16>, vector<32x32xbf16>, vector<16x32xf32> -> vector<16x32xf32>
    %37 = arith.addf %34, %36 : vector<16x32xf32>
    %38 = math.tanh %37 : vector<16x32xf32>
    %39 = vector.extract_strided_slice %12 {offsets = [80, 0], sizes = [16, 32], strides = [1, 1]} : vector<128x32xf32> to vector<16x32xf32>
    %40 = arith.truncf %38 : vector<16x32xf32> to vector<16x32xbf16>
    %cst_15 = arith.constant dense<0.000000e+00> : vector<16x32xf32>
    %41 = tpu.matmul %40, %5, %cst_15 {dimension_numbers = #tpu.dot_dimension_numbers<[1], [0], [0], [1], [0, 0, 1, 1], [], []>} : vector<16x32xbf16>, vector<32x32xbf16>, vector<16x32xf32> -> vector<16x32xf32>
    %42 = arith.addf %39, %41 : vector<16x32xf32>
    %43 = math.tanh %42 : vector<16x32xf32>
    %44 = vector.extract_strided_slice %12 {offsets = [96, 0], sizes = [16, 32], strides = [1, 1]} : vector<128x32xf32> to vector<16x32xf32>
    %45 = arith.truncf %43 : vector<16x32xf32> to vector<16x32xbf16>
    %cst_16 = arith.constant dense<0.000000e+00> : vector<16x32xf32>
    %46 = tpu.matmul %45, %5, %cst_16 {dimension_numbers = #tpu.dot_dimension_numbers<[1], [0], [0], [1], [0, 0, 1, 1], [], []>} : vector<16x32xbf16>, vector<32x32xbf16>, vector<16x32xf32> -> vector<16x32xf32>
    %47 = arith.addf %44, %46 : vector<16x32xf32>
    %48 = math.tanh %47 : vector<16x32xf32>
    %49 = vector.extract_strided_slice %12 {offsets = [112, 0], sizes = [16, 32], strides = [1, 1]} : vector<128x32xf32> to vector<16x32xf32>
    %50 = arith.truncf %48 : vector<16x32xf32> to vector<16x32xbf16>
    %cst_17 = arith.constant dense<0.000000e+00> : vector<16x32xf32>
    %51 = tpu.matmul %50, %5, %cst_17 {dimension_numbers = #tpu.dot_dimension_numbers<[1], [0], [0], [1], [0, 0, 1, 1], [], []>} : vector<16x32xbf16>, vector<32x32xbf16>, vector<16x32xf32> -> vector<16x32xf32>
    %52 = arith.addf %49, %51 : vector<16x32xf32>
    %53 = math.tanh %52 : vector<16x32xf32>
    %54 = tpu.concatenate %18, %23, %28, %33, %38, %43, %48, %53 in 0 : vector<16x32xf32>, vector<16x32xf32>, vector<16x32xf32>, vector<16x32xf32>, vector<16x32xf32>, vector<16x32xf32>, vector<16x32xf32>, vector<16x32xf32> -> vector<128x32xf32>
    %55 = arith.truncf %54 : vector<128x32xf32> to vector<128x32xbf16>
    %56 = arith.truncf %3 : vector<32x9xf32> to vector<32x9xbf16>
    %cst_18 = arith.constant dense<0.000000e+00> : vector<128x9xf32>
    %57 = tpu.matmul %55, %56, %cst_18 {dimension_numbers = #tpu.dot_dimension_numbers<[1], [0], [0], [1], [0, 0, 1, 1], [], []>} : vector<128x32xbf16>, vector<32x9xbf16>, vector<128x9xf32> -> vector<128x9xf32>
    %58 = vector.broadcast %4 : vector<1x9xf32> to vector<128x9xf32>
    %59 = arith.addf %57, %58 : vector<128x9xf32>
    %60 = vector.shape_cast %59 : vector<128x9xf32> to vector<8x16x9xf32>
    %c0_19 = arith.constant 0 : index
    %c0_20 = arith.constant 0 : index
    %c0_21 = arith.constant 0 : index
    %61 = vector.load %arg4[%c0_19, %c0_20, %c0_21] : memref<8x16x9xf32, #tpu.memory_space<vmem>>, vector<8x16x9xf32>
    tpu.vector_store %arg4[%c0_19, %c0_20, %c0_21], %60 {strides = array<i32>} : memref<8x16x9xf32, #tpu.memory_space<vmem>>, vector<8x16x9xf32>,
    return
  }
  func.func @transform_0(%arg0: i32) -> (i32, i32, i32) {
    %c0_i32 = arith.constant 0 : i32
    %c0_i32_0 = arith.constant 0 : i32
    %c0_i32_1 = arith.constant 0 : i32
    return %c0_i32, %arg0, %c0_i32_0 : i32, i32, i32
  }
  func.func @transform_1(%arg0: i32) -> (i32, i32) {
    %c0_i32 = arith.constant 0 : i32
    %c0_i32_0 = arith.constant 0 : i32
    %c0_i32_1 = arith.constant 0 : i32
    return %c0_i32, %c0_i32_0 : i32, i32
  }
  func.func @transform_2(%arg0: i32) -> (i32, i32) {
    %c0_i32 = arith.constant 0 : i32
    %c0_i32_0 = arith.constant 0 : i32
    %c0_i32_1 = arith.constant 0 : i32
    return %c0_i32, %c0_i32_0 : i32, i32
  }
  func.func @transform_3(%arg0: i32) -> (i32, i32, i32) {
    %c0_i32 = arith.constant 0 : i32
    %c0_i32_0 = arith.constant 0 : i32
    %c0_i32_1 = arith.constant 0 : i32
    return %c0_i32, %arg0, %c0_i32_0 : i32, i32, i32
  }
}

</mosaic_0001>

<llo_original>
// kernel: tpu_custom_call.1
$region0: #{tpu_custom_call.1}
  #allocation0 [shape = 'u32[]', space=smem, size = 0x4, offset = 0x4, fixed_abs, tag = 'smem constant byte address 0x4 - core index']
  #allocation1 [shape = 'u32[144,128]{1,0:T(1,128)}', space=vmem, size = 0x12000, scoped, tag = 'internal scratch']
  %s0 = inlined_call_operand.vmem [shape: f32[8,32,10], index: 0, kind: input, shape index: {}]
  %s1 = inlined_call_operand.vmem [shape: f32[48,32], index: 1, kind: input, shape index: {}]
  %s2 = inlined_call_operand.vmem [shape: f32[33,9], index: 2, kind: input, shape index: {}]
  %s3 = inlined_call_operand.vmem [shape: f32[8,32,9], index: 3, kind: output, shape index: {}]
  %s4 = sld [smem:[#allocation0]]
  $region117: #{tpu_custom_call.1} parent=0
    _
  %s6 = ssub.s32 1, %s4
  %s7 = scalar_select 0, %s6, %s4
  $region1: #{tpu_custom_call.1} parent=0
    #allocation2 [shape = 'u8[131072]{0}', space=vmem, size = 0x20000, scoped, tag = 'input window, operand 0']
    #allocation3 [shape = 'u8[131072]{0}', space=vmem, size = 0x20000, scoped, tag = 'output window, operand 0']
    loop: start=0, step=1, limit=4
    $region2: #{tpu_custom_call.1} parent=1 // loop_pre_header
      _
    $region3: #{tpu_custom_call.1} parent=1 // loop_header
      %s9 = sphi 0, %s13
      %p10 = scmp.ge.s32.totalorder %s9, 4
      %s19 = sphi 0, %s21
      %s22 = sphi 0, %s19
      %s23 = sphi 0, %s22
      %s39 = sphi 0, %s23
      %s43 = sphi 0, %s43
      %s45 = sphi 0, %s43
      %s46 = sphi 0, %s45
      %s60 = sphi 0, %s46
      %s64 = sphi 0, %s64
      %s66 = sphi 0, %s64
      %s67 = sphi 0, %s66
      %s81 = sphi 0, %s67
      %s87 = sphi 0, %s89
      %s90 = sphi 0, %s87
      %s91 = sphi 0, %s90
      %s107 = sphi 0, %s91
    $region4: #{tpu_custom_call.1} parent=1 // loop_header_branch
      %12 = sbr.rel (%p10) target = $region8
    $region5: #{tpu_custom_call.1} parent=1 // loop_body
      %s14 = ssub.s32 %s9, 1
      %s15 = ssub.s32 %s9, 2
      %s16 = sadd.s32 %s9, 1
      %s17 = ssub.s32 %s9, %s16
      %p18 = scmp.eq.s32.totalorder %s17, 0
      %s20 = sadd.s32 %s19, 1
      %s21 = scalar_select %p18, %s19, %s20
      %p24 = pneg %p18
      %p25 = scmp.eq.s32.totalorder %s9, 1
      %p26 = por %p24, %p25
      %p27 = scmp.ne.s32.totalorder %s19, %s22
      %p28 = scmp.eq.s32.totalorder %s9, 0
      %p29 = por %p27, %p28
      %p30 = scmp.ne.s32.totalorder %s19, %s22
      %p31 = scmp.eq.s32.totalorder %s14, 1
      %p32 = por %p30, %p31
      %p33 = scmp.ne.s32.totalorder %s22, %s23
      %p34 = scmp.eq.s32.totalorder %s14, 0
      %p35 = por %p33, %p34
      %p36 = scmp.ne.s32.totalorder %s22, %s23
      %p37 = scmp.eq.s32.totalorder %s15, 1
      %p38 = por %p36, %p37
      %p40 = scmp.ne.s32.totalorder %s23, %s39
      %p41 = scmp.eq.s32.totalorder %s15, 0
      %p42 = por %p40, %p41
      %s44 = sadd.s32 %s43, 1
      %p47 = scmp.eq.s32.totalorder %s9, 1
      %p48 = scmp.ne.s32.totalorder %s43, %s45
      %p49 = scmp.eq.s32.totalorder %s9, 0
      %p50 = por %p48, %p49
      %p51 = scmp.ne.s32.totalorder %s43, %s45
      %p52 = scmp.eq.s32.totalorder %s14, 1
      %p53 = por %p51, %p52
      %p54 = scmp.ne.s32.totalorder %s45, %s46
      %p55 = scmp.eq.s32.totalorder %s14, 0
      %p56 = por %p54, %p55
      %p57 = scmp.ne.s32.totalorder %s45, %s46
      %p58 = scmp.eq.s32.totalorder %s15, 1
      %p59 = por %p57, %p58
      %p61 = scmp.ne.s32.totalorder %s46, %s60
      %p62 = scmp.eq.s32.totalorder %s15, 0
      %p63 = por %p61, %p62
      %s65 = sadd.s32 %s64, 1
      %p68 = scmp.eq.s32.totalorder %s9, 1
      %p69 = scmp.ne.s32.totalorder %s64, %s66
      %p70 = scmp.eq.s32.totalorder %s9, 0
      %p71 = por %p69, %p70
      %p72 = scmp.ne.s32.totalorder %s64, %s66
      %p73 = scmp.eq.s32.totalorder %s14, 1
      %p74 = por %p72, %p73
      %p75 = scmp.ne.s32.totalorder %s66, %s67
      %p76 = scmp.eq.s32.totalorder %s14, 0
      %p77 = por %p75, %p76
      %p78 = scmp.ne.s32.totalorder %s66, %s67
      %p79 = scmp.eq.s32.totalorder %s15, 1
      %p80 = por %p78, %p79
      %p82 = scmp.ne.s32.totalorder %s67, %s81
      %p83 = scmp.eq.s32.totalorder %s15, 0
      %p84 = por %p82, %p83
      %s85 = ssub.s32 %s9, %s16
      %p86 = scmp.eq.s32.totalorder %s85, 0
      %s88 = sadd.s32 %s87, 1
      %s89 = scalar_select %p86, %s87, %s88
      %p92 = pneg %p86
      %p93 = scmp.eq.s32.totalorder %s9, 1
      %p94 = por %p92, %p93
      %p95 = scmp.ne.s32.totalorder %s87, %s90
      %p96 = scmp.eq.s32.totalorder %s9, 0
      %p97 = por %p95, %p96
      %p98 = scmp.ne.s32.totalorder %s87, %s90
      %p99 = scmp.eq.s32.totalorder %s14, 1
      %p100 = por %p98, %p99
      %p101 = scmp.ne.s32.totalorder %s90, %s91
      %p102 = scmp.eq.s32.totalorder %s14, 0
      %p103 = por %p101, %p102
      %p104 = scmp.ne.s32.totalorder %s90, %s91
      %p105 = scmp.eq.s32.totalorder %s15, 1
      %p106 = por %p104, %p105
      %p108 = scmp.ne.s32.totalorder %s91, %s107
      %p109 = scmp.eq.s32.totalorder %s15, 0
      %p110 = por %p108, %p109
      %p111 = scmp.le.s32.totalorder 1, %s9
      %p112 = scmp.lt.s32.totalorder %s9, 3
      %p113 = pnand %p111, %p112
      %p114 = pneg %p113
      // Predicated region
      $region9: #{tpu_custom_call.1} parent=5 // pred_check
        _
      $region10: #{tpu_custom_call.1} parent=5 // pred_check_branch
        %116 = sbr.rel (%p113) target = $region12
      $region11: #{tpu_custom_call.1} parent=5 // pred_region
        %s117 = ssub.s32 %s9, 1
        // Predicated region
        $region13: #{tpu_custom_call.1} parent=11 // pred_check
          %p118 = pneg %p56
        $region14: #{tpu_custom_call.1} parent=11 // pred_check_branch
          %120 = sbr.rel (%p118) target = $region16
        $region15: #{tpu_custom_call.1} parent=11 // pred_region
          _
        $region16: #{tpu_custom_call.1} parent=11 // pred_fallthru
          _
        // Predicated region
        $region17: #{tpu_custom_call.1} parent=11 // pred_check
          %p121 = pneg %p77
        $region18: #{tpu_custom_call.1} parent=11 // pred_check_branch
          %123 = sbr.rel (%p121) target = $region20
        $region19: #{tpu_custom_call.1} parent=11 // pred_region
          _
        $region20: #{tpu_custom_call.1} parent=11 // pred_fallthru
          _
      $region12: #{tpu_custom_call.1} parent=5 // pred_fallthru
        _
      %p124 = scmp.lt.s32.totalorder %s9, 2
      // Predicated region
      $region21: #{tpu_custom_call.1} parent=5 // pred_check
        %p125 = pneg %p124
      $region22: #{tpu_custom_call.1} parent=5 // pred_check_branch
        %127 = sbr.rel (%p125) target = $region24
      $region23: #{tpu_custom_call.1} parent=5 // pred_region
        // Predicated region
        $region25: #{tpu_custom_call.1} parent=23 // pred_check
          %p128 = pneg %p29
        $region26: #{tpu_custom_call.1} parent=23 // pred_check_branch
          %130 = sbr.rel (%p128) target = $region28
        $region27: #{tpu_custom_call.1} parent=23 // pred_region
          %s131 = sand.u32 %s19, 1
          %s132 = sand.u32 %s19, 1
          %s133 = smul.addr %s132, 128
          %s134 = scalar_lea.vmem [#allocation2], %s133
          %s135 = smul.u32 2, %s9
          %s136 = smul.addr %s135, 8
          %s137 = scalar_lea.vmem %s0, %s136
          // Predicated region
          $region29: #{tpu_custom_call.1} parent=27 // pred_check
            _
          $region30: #{tpu_custom_call.1} parent=27 // pred_check_branch
            %139 = sbr.rel (0) target = $region32
          $region31: #{tpu_custom_call.1} parent=27 // pred_region
            // Predicated region
            $region33: #{tpu_custom_call.1} parent=31 // pred_check
              _
            $region34: #{tpu_custom_call.1} parent=31 // pred_check_branch
              %141 = sbr.rel (0) target = $region36
            $region35: #{tpu_custom_call.1} parent=31 // pred_region
              // Predicated region
              $region48: #{tpu_custom_call.1} parent=35 // pred_check
                _
              $region49: #{tpu_custom_call.1} parent=35 // pred_check_branch
                %187 = sbr.rel (0) target = $region51
              $region50: #{tpu_custom_call.1} parent=35 // pred_region
                loop: start=0, step=1, limit=1
                $region52: #{tpu_custom_call.1} parent=50 // loop_pre_header
                  _
                $region53: #{tpu_custom_call.1} parent=50 // loop_header
                  %s189 = sphi 0, %s193
                  %p190 = scmp.ge.s32.totalorder %s189, 1
                  %s194 = sphi %s137, %s137
                  %s195 = sphi %s134, %s134
                $region54: #{tpu_custom_call.1} parent=50 // loop_header_branch
                  %192 = sbr.rel (%p190) target = $region58
                $region55: #{tpu_custom_call.1} parent=50 // loop_body
                  %v196 = vld [vmem:[%s194] sm:$0xff]
                  %197 = vst [vmem:[%s195] sm:$0xff] %v196
                  %v198 = vld [vmem:[%s194 + $0x8] sm:$0xff]
                  %199 = vst [vmem:[%s195 + $0x8] sm:$0xff] %v198
                  %v200 = vld [vmem:[%s194 + $0x20] sm:$0xff]
                  %201 = vst [vmem:[%s195 + $0x10] sm:$0xff] %v200
                  %v202 = vld [vmem:[%s194 + $0x28] sm:$0xff]
                  %203 = vst [vmem:[%s195 + $0x18] sm:$0xff] %v202
                  %v204 = vld [vmem:[%s194 + $0x40] sm:$0xff]
                  %205 = vst [vmem:[%s195 + $0x20] sm:$0xff] %v204
                  %v206 = vld [vmem:[%s194 + $0x48] sm:$0xff]
                  %207 = vst [vmem:[%s195 + $0x28] sm:$0xff] %v206
                  %v208 = vld [vmem:[%s194 + $0x60] sm:$0xff]
                  %209 = vst [vmem:[%s195 + $0x30] sm:$0xff] %v208
                  %v210 = vld [vmem:[%s194 + $0x68] sm:$0xff]
                  %211 = vst [vmem:[%s195 + $0x38] sm:$0xff] %v210
                  %v212 = vld [vmem:[%s194 + $0x80] sm:$0xff]
                  %213 = vst [vmem:[%s195 + $0x40] sm:$0xff] %v212
                  %v214 = vld [vmem:[%s194 + $0x88] sm:$0xff]
                  %215 = vst [vmem:[%s195 + $0x48] sm:$0xff] %v214
                  %v216 = vld [vmem:[%s194 + $0xa0] sm:$0xff]
                  %217 = vst [vmem:[%s195 + $0x50] sm:$0xff] %v216
                  %v218 = vld [vmem:[%s194 + $0xa8] sm:$0xff]
                  %219 = vst [vmem:[%s195 + $0x58] sm:$0xff] %v218
                  %v220 = vld [vmem:[%s194 + $0xc0] sm:$0xff]
                  %221 = vst [vmem:[%s195 + $0x60] sm:$0xff] %v220
                  %v222 = vld [vmem:[%s194 + $0xc8] sm:$0xff]
                  %223 = vst [vmem:[%s195 + $0x68] sm:$0xff] %v222
                  %v224 = vld [vmem:[%s194 + $0xe0] sm:$0xff]
                  %225 = vst [vmem:[%s195 + $0x70] sm:$0xff] %v224
                  %v226 = vld [vmem:[%s194 + $0xe8] sm:$0xff]
                  %227 = vst [vmem:[%s195 + $0x78] sm:$0xff] %v226
                $region56: #{tpu_custom_call.1} parent=50 // loop_footer
                  %s193 = sadd.s32 1, %s189
                $region57: #{tpu_custom_call.1} parent=50 // loop_footer_branch
                  %188 = sbr.rel target = $region53
                $region58: #{tpu_custom_call.1} parent=50 // loop_exit
                  _
              $region51: #{tpu_custom_call.1} parent=35 // pred_fallthru
                _
              // Predicated region
              $region59: #{tpu_custom_call.1} parent=35 // pred_check
                _
              $region60: #{tpu_custom_call.1} parent=35 // pred_check_branch
                %229 = sbr.rel target = $region62
              $region61: #{tpu_custom_call.1} parent=35 // pred_region
                _
              $region62: #{tpu_custom_call.1} parent=35 // pred_fallthru
                _
            $region36: #{tpu_custom_call.1} parent=31 // pred_fallthru
              _
            // Predicated region
            $region37: #{tpu_custom_call.1} parent=31 // pred_check
              _
            $region38: #{tpu_custom_call.1} parent=31 // pred_check_branch
              %143 = sbr.rel target = $region40
            $region39: #{tpu_custom_call.1} parent=31 // pred_region
              %s145 = ssub.s32 256, 1
              loop: start=0, step=1, limit=1
              $region41: #{tpu_custom_call.1} parent=39 // loop_pre_header
                _
              $region42: #{tpu_custom_call.1} parent=39 // loop_header
                %s147 = sphi 0, %s151
                %p148 = scmp.ge.s32.totalorder %s147, 1
                %s152 = sphi %s137, %s137
                %s153 = sphi %s134, %s134
              $region43: #{tpu_custom_call.1} parent=39 // loop_header_branch
                %150 = sbr.rel (%p148) target = $region47
              $region44: #{tpu_custom_call.1} parent=39 // loop_body
                %v154 = vld [vmem:[%s152] sm:%s145]
                %155 = vst [vmem:[%s153] sm:%s145] %v154
                %v156 = vld [vmem:[%s152 + $0x8] sm:%s145]
                %157 = vst [vmem:[%s153 + $0x8] sm:%s145] %v156
                %v158 = vld [vmem:[%s152 + $0x20] sm:%s145]
                %159 = vst [vmem:[%s153 + $0x10] sm:%s145] %v158
                %v160 = vld [vmem:[%s152 + $0x28] sm:%s145]
                %161 = vst [vmem:[%s153 + $0x18] sm:%s145] %v160
                %v162 = vld [vmem:[%s152 + $0x40] sm:%s145]
                %163 = vst [vmem:[%s153 + $0x20] sm:%s145] %v162
                %v164 = vld [vmem:[%s152 + $0x48] sm:%s145]
                %165 = vst [vmem:[%s153 + $0x28] sm:%s145] %v164
                %v166 = vld [vmem:[%s152 + $0x60] sm:%s145]
                %167 = vst [vmem:[%s153 + $0x30] sm:%s145] %v166
                %v168 = vld [vmem:[%s152 + $0x68] sm:%s145]
                %169 = vst [vmem:[%s153 + $0x38] sm:%s145] %v168
                %v170 = vld [vmem:[%s152 + $0x80] sm:%s145]
                %171 = vst [vmem:[%s153 + $0x40] sm:%s145] %v170
                %v172 = vld [vmem:[%s152 + $0x88] sm:%s145]
                %173 = vst [vmem:[%s153 + $0x48] sm:%s145] %v172
                %v174 = vld [vmem:[%s152 + $0xa0] sm:%s145]
                %175 = vst [vmem:[%s153 + $0x50] sm:%s145] %v174
                %v176 = vld [vmem:[%s152 + $0xa8] sm:%s145]
                %177 = vst [vmem:[%s153 + $0x58] sm:%s145] %v176
                %v178 = vld [vmem:[%s152 + $0xc0] sm:%s145]
                %179 = vst [vmem:[%s153 + $0x60] sm:%s145] %v178
                %v180 = vld [vmem:[%s152 + $0xc8] sm:%s145]
                %181 = vst [vmem:[%s153 + $0x68] sm:%s145] %v180
                %v182 = vld [vmem:[%s152 + $0xe0] sm:%s145]
                %183 = vst [vmem:[%s153 + $0x70] sm:%s145] %v182
                %v184 = vld [vmem:[%s152 + $0xe8] sm:%s145]
                %185 = vst [vmem:[%s153 + $0x78] sm:%s145] %v184
              $region45: #{tpu_custom_call.1} parent=39 // loop_footer
                %s151 = sadd.s32 1, %s147
              $region46: #{tpu_custom_call.1} parent=39 // loop_footer_branch
                %146 = sbr.rel target = $region42
              $region47: #{tpu_custom_call.1} parent=39 // loop_exit
                _
            $region40: #{tpu_custom_call.1} parent=31 // pred_fallthru
              _
          $region32: #{tpu_custom_call.1} parent=27 // pred_fallthru
            _
          %230 = vnop
        $region28: #{tpu_custom_call.1} parent=23 // pred_fallthru
          _
      $region24: #{tpu_custom_call.1} parent=5 // pred_fallthru
        _
      %p231 = scmp.le.s32.totalorder 1, %s9
      %p232 = scmp.lt.s32.totalorder %s9, 3
      %p233 = pnand %p231, %p232
      %p234 = pneg %p233
      // Predicated region
      $region63: #{tpu_custom_call.1} parent=5 // pred_check
        _
      $region64: #{tpu_custom_call.1} parent=5 // pred_check_branch
        %236 = sbr.rel (%p233) target = $region66
      $region65: #{tpu_custom_call.1} parent=5 // pred_region
        %s237 = ssub.s32 %s9, 1
        %s238 = sand.u32 %s22, 1
        %s239 = sand.u32 %s22, 1
        %s240 = smul.addr %s239, 128
        %s241 = scalar_lea.vmem [#allocation2], %s240
        // Predicated region
        $region67: #{tpu_custom_call.1} parent=65 // pred_check
          %p242 = pneg %p35
        $region68: #{tpu_custom_call.1} parent=65 // pred_check_branch
          %244 = sbr.rel (%p242) target = $region70
        $region69: #{tpu_custom_call.1} parent=65 // pred_region
          _
        $region70: #{tpu_custom_call.1} parent=65 // pred_fallthru
          _
        %s245 = sand.u32 %s22, 1
        %s246 = sand.u32 %s22, 1
        %s247 = smul.addr %s246, 128
        %s248 = scalar_lea.vmem [#allocation2], %s247
        %p249 = pneg %p35
        %p250 = pneg %p32
        %p251 = pneg %p56
        %p252 = pneg %p53
        %p253 = pneg %p77
        %p254 = pneg %p74
        %p255 = pneg %p103
        %p256 = pneg %p100
        %s257 = sand.u32 %s90, 1
        %s258 = sand.u32 %s90, 1
        %s259 = smul.addr %s258, 128
        %s260 = scalar_lea.vmem [#allocation3], %s259
        %s261 = smul.u32 2, %s14
        %s262 = smul.u32 2, %s14
        %v264 = vld [vmem:[%s1] sm:$0xff]
        %v265 = vld [vmem:[%s1 + $0x8] sm:$0x3]
        %v266 = vld [vmem:[%s1 + $0xa] sm:$0x1]
        %v267 = vld [vmem:[%s1 + $0x10] sm:$0xff]
        %v268 = vld [vmem:[%s1 + $0x18] sm:$0xff]
        %v269 = vld [vmem:[%s1 + $0x20] sm:$0xff]
        %v270 = vld [vmem:[%s1 + $0x28] sm:$0xff]
        %v271 = vld [vmem:[%s2] sm:$0xff]
        %v272 = vld [vmem:[%s2 + $0x8] sm:$0xff]
        %v273 = vld [vmem:[%s2 + $0x10] sm:$0xff]
        %v274 = vld [vmem:[%s2 + $0x18] sm:$0xff]
        %v275 = vld [vmem:[%s2 + $0x20] sm:$0x1]
        %v276 = vpack.c.bf16 %v268, %v267
        %v277 = vpack.c.bf16 %v270, %v269
        %v278 = vld [vmem:[%s241] sm:$0xff]
        %v279 = vld [vmem:[%s241 + $0x8] sm:$0xff]
        %v280 = vld [vmem:[%s241 + $0x10] sm:$0xff]
        %v281 = vld [vmem:[%s241 + $0x18] sm:$0xff]
        %v282 = vld [vmem:[%s241 + $0x20] sm:$0xff]
        %v283 = vld [vmem:[%s241 + $0x28] sm:$0xff]
        %v284 = vld [vmem:[%s241 + $0x30] sm:$0xff]
        %v285 = vld [vmem:[%s241 + $0x38] sm:$0xff]
        %v286 = vld [vmem:[%s241 + $0x40] sm:$0xff]
        %v287 = vld [vmem:[%s241 + $0x48] sm:$0xff]
        %v288 = vld [vmem:[%s241 + $0x50] sm:$0xff]
        %v289 = vld [vmem:[%s241 + $0x58] sm:$0xff]
        %v290 = vld [vmem:[%s241 + $0x60] sm:$0xff]
        %v291 = vld [vmem:[%s241 + $0x68] sm:$0xff]
        %v292 = vld [vmem:[%s241 + $0x70] sm:$0xff]
        %v293 = vld [vmem:[%s241 + $0x78] sm:$0xff]
        %v294 = vpack.c.bf16 %v279, %v278
        %v295 = vpack.c.bf16 %v281, %v280
        %v296 = vpack.c.bf16 %v283, %v282
        %v297 = vpack.c.bf16 %v285, %v284
        %v298 = vpack.c.bf16 %v287, %v286
        %v299 = vpack.c.bf16 %v289, %v288
        %v300 = vpack.c.bf16 %v291, %v290
        %v301 = vpack.c.bf16 %v293, %v292
        %v302 = vpack.c.bf16 %v265, %v264
        %v303 = vlaneseq
        %v304 = vshrl.u32 %v303, 7
        %v305 = vsub.s32 0, %v304
        %v306 = vrot.slane %v266, %v305
        %vm307 = vcmask 80896
        %v309 = vsel %vm307, %v294, 0
        %v312 = vsel %vm307, %v295, 0
        %v315 = vsel %vm307, %v296, 0
        %v318 = vsel %vm307, %v297, 0
        %v321 = vsel %vm307, %v298, 0
        %v324 = vsel %vm307, %v299, 0
        %v327 = vsel %vm307, %v300, 0
        %v330 = vsel %vm307, %v301, 0
        %vm332 = vcmask 1044480
        %v334 = vsel %vm332, %v302, 0
        %336 = vmatprep.subr.bf16.mxu0 0
        %337 = vmatpush1.bf16.msra.mxu0 0
        %338 = vmatprep.subr.bf16.mxu0 0
        %339 = vmatpush1.bf16.msra.mxu0 0
        %340 = vmatprep.subr.bf16.mxu0 0
        %341 = vmatpush1.bf16.msra.mxu0 0
        %342 = vmatprep.subr.bf16.mxu0 0
        %343 = vmatpush1.bf16.msra.mxu0 0
        %344 = vmatprep.subr.bf16.mxu0 0
        %345 = vmatpush1.bf16.msra.mxu0 0
        %346 = vmatprep.subr.bf16.mxu0 0
        %347 = vmatpush1.bf16.msra.mxu0 0
        %348 = vmatprep.subr.bf16.mxu0 0
        %349 = vmatpush1.bf16.msra.mxu0 0
        %350 = vmatprep.subr.bf16.mxu0 0
        %351 = vmatpush1.bf16.msra.mxu0 %v334
        %352 = vmatprep.subr.bf16.mxu0 0
        %353 = vmatpush2.bf16.msra.mxu0 0
        %354 = vmatprep.subr.bf16.mxu0 0
        %355 = vmatpush2.bf16.msra.mxu0 0
        %356 = vmatprep.subr.bf16.mxu0 0
        %357 = vmatpush2.bf16.msra.mxu0 0
        %358 = vmatprep.subr.bf16.mxu0 0
        %359 = vmatpush2.bf16.msra.mxu0 0
        %360 = vmatprep.subr.bf16.mxu0 0
        %361 = vmatpush2.bf16.msra.mxu0 0
        %362 = vmatprep.subr.bf16.mxu0 0
        %363 = vmatpush2.bf16.msra.mxu0 0
        %364 = vmatprep.subr.bf16.mxu0 0
        %365 = vmatpush2.bf16.msra.mxu0 0
        %366 = vmatprep.subr.bf16.mxu0 0
        %367 = vmatpush2.bf16.msra.mxu0 0
        %368 = vmatprep.mubr.bf16.mxu0 0
        %369 = vmatmul.mubr.bf16.gmra.mxu0 %v309
        %v370 = vpop.f32.mrf.mxu0
        %v371 = vadd.f32 %v306, %v370
        %v372 = vpop.f32.mrf.mxu0
        %v373 = vpop.f32.mrf.mxu0
        %v374 = vadd.f32 %v306, %v373
        %v375 = vpop.f32.mrf.mxu0
        %376 = vmatprep.mubr.bf16.mxu0 0
        %377 = vmatmul.mubr.bf16.gmra.mxu0 %v312
        %v378 = vpop.f32.mrf.mxu0
        %v379 = vadd.f32 %v306, %v378
        %v380 = vpop.f32.mrf.mxu0
        %v381 = vpop.f32.mrf.mxu0
        %v382 = vadd.f32 %v306, %v381
        %v383 = vpop.f32.mrf.mxu0
        %384 = vmatprep.mubr.bf16.mxu0 0
        %385 = vmatmul.mubr.bf16.gmra.mxu0 %v315
        %v386 = vpop.f32.mrf.mxu0
        %v387 = vadd.f32 %v306, %v386
        %v388 = vpop.f32.mrf.mxu0
        %v389 = vpop.f32.mrf.mxu0
        %v390 = vadd.f32 %v306, %v389
        %v391 = vpop.f32.mrf.mxu0
        %392 = vmatprep.mubr.bf16.mxu0 0
        %393 = vmatmul.mubr.bf16.gmra.mxu0 %v318
        %v394 = vpop.f32.mrf.mxu0
        %v395 = vadd.f32 %v306, %v394
        %v396 = vpop.f32.mrf.mxu0
        %v397 = vpop.f32.mrf.mxu0
        %v398 = vadd.f32 %v306, %v397
        %v399 = vpop.f32.mrf.mxu0
        %400 = vmatprep.mubr.bf16.mxu0 0
        %401 = vmatmul.mubr.bf16.gmra.mxu0 %v321
        %v402 = vpop.f32.mrf.mxu0
        %v403 = vadd.f32 %v306, %v402
        %v404 = vpop.f32.mrf.mxu0
        %v405 = vpop.f32.mrf.mxu0
        %v406 = vadd.f32 %v306, %v405
        %v407 = vpop.f32.mrf.mxu0
        %408 = vmatprep.mubr.bf16.mxu0 0
        %409 = vmatmul.mubr.bf16.gmra.mxu0 %v324
        %v410 = vpop.f32.mrf.mxu0
        %v411 = vadd.f32 %v306, %v410
        %v412 = vpop.f32.mrf.mxu0
        %v413 = vpop.f32.mrf.mxu0
        %v414 = vadd.f32 %v306, %v413
        %v415 = vpop.f32.mrf.mxu0
        %416 = vmatprep.mubr.bf16.mxu0 0
        %417 = vmatmul.mubr.bf16.gmra.mxu0 %v327
        %v418 = vpop.f32.mrf.mxu0
        %v419 = vadd.f32 %v306, %v418
        %v420 = vpop.f32.mrf.mxu0
        %v421 = vpop.f32.mrf.mxu0
        %v422 = vadd.f32 %v306, %v421
        %v423 = vpop.f32.mrf.mxu0
        %424 = vmatprep.mubr.bf16.mxu0 0
        %425 = vmatmul.mubr.bf16.gmra.mxu0 %v330
        %v426 = vpop.f32.mrf.mxu0
        %v427 = vadd.f32 %v306, %v426
        %v428 = vpop.f32.mrf.mxu0
        %v429 = vpop.f32.mrf.mxu0
        %v430 = vadd.f32 %v306, %v429
        %v431 = vpop.f32.mrf.mxu0
        %432 = vdwg.mxu0
        %vm433 = vcmask 261120
        %v435 = vsel %vm433, 0, 0
        %437 = vmatprep.subr.bf16.mxu0 0
        %438 = vmatpush1.bf16.msra.mxu0 0
        %439 = vmatprep.subr.bf16.mxu0 0
        %440 = vmatpush1.bf16.msra.mxu0 0
        %441 = vmatprep.subr.bf16.mxu0 0
        %442 = vmatpush1.bf16.msra.mxu0 0
        %443 = vmatprep.subr.bf16.mxu0 0
        %444 = vmatpush1.bf16.msra.mxu0 0
        %445 = vmatprep.subr.bf16.mxu0 0
        %446 = vmatpush1.bf16.msra.mxu0 0
        %447 = vmatprep.subr.bf16.mxu0 0
        %448 = vmatpush1.bf16.msra.mxu0 0
        %449 = vmatprep.subr.bf16.mxu0 0
        %450 = vmatpush1.bf16.msra.mxu0 %v277
        %451 = vmatprep.subr.bf16.mxu0 0
        %452 = vmatpush1.bf16.msra.mxu0 %v276
        %453 = vmatprep.subr.bf16.mxu0 0
        %454 = vmatpush2.bf16.msra.mxu0 0
        %455 = vmatprep.subr.bf16.mxu0 0
        %456 = vmatpush2.bf16.msra.mxu0 0
        %457 = vmatprep.subr.bf16.mxu0 0
        %458 = vmatpush2.bf16.msra.mxu0 0
        %459 = vmatprep.subr.bf16.mxu0 0
        %460 = vmatpush2.bf16.msra.mxu0 0
        %461 = vmatprep.subr.bf16.mxu0 0
        %462 = vmatpush2.bf16.msra.mxu0 0
        %463 = vmatprep.subr.bf16.mxu0 0
        %464 = vmatpush2.bf16.msra.mxu0 0
        %465 = vmatprep.subr.bf16.mxu0 0
        %466 = vmatpush2.bf16.msra.mxu0 0
        %467 = vmatprep.subr.bf16.mxu0 0
        %468 = vmatpush2.bf16.msra.mxu0 0
        %469 = vmatprep.mubr.bf16.mxu0 0
        %470 = vmatmul.mubr.bf16.gmra.mxu0 %v435
        %v471 = vpop.f32.mrf.mxu0
        %v472 = vadd.f32 0.0, %v471
        %v473 = vpop.f32.mrf.mxu0
        %v474 = vpop.f32.mrf.mxu0
        %v475 = vadd.f32 0.0, %v474
        %v476 = vpop.f32.mrf.mxu0
        %477 = vdwg.mxu0
        %v478 = vadd.f32 %v371, %v472
        %v479 = vadd.f32 %v374, %v475
        %v480 = vtanh.pop %v478
        %v481 = vtanh.pop %v479
        %v482 = vpack.c.bf16 %v481, %v480
        %v484 = vsel %vm433, %v482, 0
        %486 = vmatprep.subr.bf16.mxu0 0
        %487 = vmatpush1.bf16.msra.mxu0 0
        %488 = vmatprep.subr.bf16.mxu0 0
        %489 = vmatpush1.bf16.msra.mxu0 0
        %490 = vmatprep.subr.bf16.mxu0 0
        %491 = vmatpush1.bf16.msra.mxu0 0
        %492 = vmatprep.subr.bf16.mxu0 0
        %493 = vmatpush1.bf16.msra.mxu0 0
        %494 = vmatprep.subr.bf16.mxu0 0
        %495 = vmatpush1.bf16.msra.mxu0 0
        %496 = vmatprep.subr.bf16.mxu0 0
        %497 = vmatpush1.bf16.msra.mxu0 0
        %498 = vmatprep.subr.bf16.mxu0 0
        %499 = vmatpush1.bf16.msra.mxu0 %v277
        %500 = vmatprep.subr.bf16.mxu0 0
        %501 = vmatpush1.bf16.msra.mxu0 %v276
        %502 = vmatprep.subr.bf16.mxu0 0
        %503 = vmatpush2.bf16.msra.mxu0 0
        %504 = vmatprep.subr.bf16.mxu0 0
        %505 = vmatpush2.bf16.msra.mxu0 0
        %506 = vmatprep.subr.bf16.mxu0 0
        %507 = vmatpush2.bf16.msra.mxu0 0
        %508 = vmatprep.subr.bf16.mxu0 0
        %509 = vmatpush2.bf16.msra.mxu0 0
        %510 = vmatprep.subr.bf16.mxu0 0
        %511 = vmatpush2.bf16.msra.mxu0 0
        %512 = vmatprep.subr.bf16.mxu0 0
        %513 = vmatpush2.bf16.msra.mxu0 0
        %514 = vmatprep.subr.bf16.mxu0 0
        %515 = vmatpush2.bf16.msra.mxu0 0
        %516 = vmatprep.subr.bf16.mxu0 0
        %517 = vmatpush2.bf16.msra.mxu0 0
        %518 = vmatprep.mubr.bf16.mxu0 0
        %519 = vmatmul.mubr.bf16.gmra.mxu0 %v484
        %v520 = vpop.f32.mrf.mxu0
        %v521 = vadd.f32 0.0, %v520
        %v522 = vpop.f32.mrf.mxu0
        %v523 = vpop.f32.mrf.mxu0
        %v524 = vadd.f32 0.0, %v523
        %v525 = vpop.f32.mrf.mxu0
        %526 = vdwg.mxu0
        %v527 = vadd.f32 %v379, %v521
        %v528 = vadd.f32 %v382, %v524
        %v529 = vtanh.pop %v527
        %v530 = vtanh.pop %v528
        %v531 = vpack.c.bf16 %v530, %v529
        %v533 = vsel %vm433, %v531, 0
        %535 = vmatprep.subr.bf16.mxu0 0
        %536 = vmatpush1.bf16.msra.mxu0 0
        %537 = vmatprep.subr.bf16.mxu0 0
        %538 = vmatpush1.bf16.msra.mxu0 0
        %539 = vmatprep.subr.bf16.mxu0 0
        %540 = vmatpush1.bf16.msra.mxu0 0
        %541 = vmatprep.subr.bf16.mxu0 0
        %542 = vmatpush1.bf16.msra.mxu0 0
        %543 = vmatprep.subr.bf16.mxu0 0
        %544 = vmatpush1.bf16.msra.mxu0 0
        %545 = vmatprep.subr.bf16.mxu0 0
        %546 = vmatpush1.bf16.msra.mxu0 0
        %547 = vmatprep.subr.bf16.mxu0 0
        %548 = vmatpush1.bf16.msra.mxu0 %v277
        %549 = vmatprep.subr.bf16.mxu0 0
        %550 = vmatpush1.bf16.msra.mxu0 %v276
        %551 = vmatprep.subr.bf16.mxu0 0
        %552 = vmatpush2.bf16.msra.mxu0 0
        %553 = vmatprep.subr.bf16.mxu0 0
        %554 = vmatpush2.bf16.msra.mxu0 0
        %555 = vmatprep.subr.bf16.mxu0 0
        %556 = vmatpush2.bf16.msra.mxu0 0
        %557 = vmatprep.subr.bf16.mxu0 0
        %558 = vmatpush2.bf16.msra.mxu0 0
        %559 = vmatprep.subr.bf16.mxu0 0
        %560 = vmatpush2.bf16.msra.mxu0 0
        %561 = vmatprep.subr.bf16.mxu0 0
        %562 = vmatpush2.bf16.msra.mxu0 0
        %563 = vmatprep.subr.bf16.mxu0 0
        %564 = vmatpush2.bf16.msra.mxu0 0
        %565 = vmatprep.subr.bf16.mxu0 0
        %566 = vmatpush2.bf16.msra.mxu0 0
        %567 = vmatprep.mubr.bf16.mxu0 0
        %568 = vmatmul.mubr.bf16.gmra.mxu0 %v533
        %v569 = vpop.f32.mrf.mxu0
        %v570 = vadd.f32 0.0, %v569
        %v571 = vpop.f32.mrf.mxu0
        %v572 = vpop.f32.mrf.mxu0
        %v573 = vadd.f32 0.0, %v572
        %v574 = vpop.f32.mrf.mxu0
        %575 = vdwg.mxu0
        %v576 = vadd.f32 %v387, %v570
        %v577 = vadd.f32 %v390, %v573
        %v578 = vtanh.pop %v576
        %v579 = vtanh.pop %v577
        %v580 = vpack.c.bf16 %v579, %v578
        %v582 = vsel %vm433, %v580, 0
        %584 = vmatprep.subr.bf16.mxu0 0
        %585 = vmatpush1.bf16.msra.mxu0 0
        %586 = vmatprep.subr.bf16.mxu0 0
        %587 = vmatpush1.bf16.msra.mxu0 0
        %588 = vmatprep.subr.bf16.mxu0 0
        %589 = vmatpush1.bf16.msra.mxu0 0
        %590 = vmatprep.subr.bf16.mxu0 0
        %591 = vmatpush1.bf16.msra.mxu0 0
        %592 = vmatprep.subr.bf16.mxu0 0
        %593 = vmatpush1.bf16.msra.mxu0 0
        %594 = vmatprep.subr.bf16.mxu0 0
        %595 = vmatpush1.bf16.msra.mxu0 0
        %596 = vmatprep.subr.bf16.mxu0 0
        %597 = vmatpush1.bf16.msra.mxu0 %v277
        %598 = vmatprep.subr.bf16.mxu0 0
        %599 = vmatpush1.bf16.msra.mxu0 %v276
        %600 = vmatprep.subr.bf16.mxu0 0
        %601 = vmatpush2.bf16.msra.mxu0 0
        %602 = vmatprep.subr.bf16.mxu0 0
        %603 = vmatpush2.bf16.msra.mxu0 0
        %604 = vmatprep.subr.bf16.mxu0 0
        %605 = vmatpush2.bf16.msra.mxu0 0
        %606 = vmatprep.subr.bf16.mxu0 0
        %607 = vmatpush2.bf16.msra.mxu0 0
        %608 = vmatprep.subr.bf16.mxu0 0
        %609 = vmatpush2.bf16.msra.mxu0 0
        %610 = vmatprep.subr.bf16.mxu0 0
        %611 = vmatpush2.bf16.msra.mxu0 0
        %612 = vmatprep.subr.bf16.mxu0 0
        %613 = vmatpush2.bf16.msra.mxu0 0
        %614 = vmatprep.subr.bf16.mxu0 0
        %615 = vmatpush2.bf16.msra.mxu0 0
        %616 = vmatprep.mubr.bf16.mxu0 0
        %617 = vmatmul.mubr.bf16.gmra.mxu0 %v582
        %v618 = vpop.f32.mrf.mxu0
        %v619 = vadd.f32 0.0, %v618
        %v620 = vpop.f32.mrf.mxu0
        %v621 = vpop.f32.mrf.mxu0
        %v622 = vadd.f32 0.0, %v621
        %v623 = vpop.f32.mrf.mxu0
        %624 = vdwg.mxu0
        %v625 = vadd.f32 %v395, %v619
        %v626 = vadd.f32 %v398, %v622
        %v627 = vtanh.pop %v625
        %v628 = vtanh.pop %v626
        %v629 = vpack.c.bf16 %v628, %v627
        %v631 = vsel %vm433, %v629, 0
        %633 = vmatprep.subr.bf16.mxu0 0
        %634 = vmatpush1.bf16.msra.mxu0 0
        %635 = vmatprep.subr.bf16.mxu0 0
        %636 = vmatpush1.bf16.msra.mxu0 0
        %637 = vmatprep.subr.bf16.mxu0 0
        %638 = vmatpush1.bf16.msra.mxu0 0
        %639 = vmatprep.subr.bf16.mxu0 0
        %640 = vmatpush1.bf16.msra.mxu0 0
        %641 = vmatprep.subr.bf16.mxu0 0
        %642 = vmatpush1.bf16.msra.mxu0 0
        %643 = vmatprep.subr.bf16.mxu0 0
        %644 = vmatpush1.bf16.msra.mxu0 0
        %645 = vmatprep.subr.bf16.mxu0 0
        %646 = vmatpush1.bf16.msra.mxu0 %v277
        %647 = vmatprep.subr.bf16.mxu0 0
        %648 = vmatpush1.bf16.msra.mxu0 %v276
        %649 = vmatprep.subr.bf16.mxu0 0
        %650 = vmatpush2.bf16.msra.mxu0 0
        %651 = vmatprep.subr.bf16.mxu0 0
        %652 = vmatpush2.bf16.msra.mxu0 0
        %653 = vmatprep.subr.bf16.mxu0 0
        %654 = vmatpush2.bf16.msra.mxu0 0
        %655 = vmatprep.subr.bf16.mxu0 0
        %656 = vmatpush2.bf16.msra.mxu0 0
        %657 = vmatprep.subr.bf16.mxu0 0
        %658 = vmatpush2.bf16.msra.mxu0 0
        %659 = vmatprep.subr.bf16.mxu0 0
        %660 = vmatpush2.bf16.msra.mxu0 0
        %661 = vmatprep.subr.bf16.mxu0 0
        %662 = vmatpush2.bf16.msra.mxu0 0
        %663 = vmatprep.subr.bf16.mxu0 0
        %664 = vmatpush2.bf16.msra.mxu0 0
        %665 = vmatprep.mubr.bf16.mxu0 0
        %666 = vmatmul.mubr.bf16.gmra.mxu0 %v631
        %v667 = vpop.f32.mrf.mxu0
        %v668 = vadd.f32 0.0, %v667
        %v669 = vpop.f32.mrf.mxu0
        %v670 = vpop.f32.mrf.mxu0
        %v671 = vadd.f32 0.0, %v670
        %v672 = vpop.f32.mrf.mxu0
        %673 = vdwg.mxu0
        %v674 = vadd.f32 %v403, %v668
        %v675 = vadd.f32 %v406, %v671
        %v676 = vtanh.pop %v674
        %v677 = vtanh.pop %v675
        %v678 = vpack.c.bf16 %v677, %v676
        %v680 = vsel %vm433, %v678, 0
        %682 = vmatprep.subr.bf16.mxu0 0
        %683 = vmatpush1.bf16.msra.mxu0 0
        %684 = vmatprep.subr.bf16.mxu0 0
        %685 = vmatpush1.bf16.msra.mxu0 0
        %686 = vmatprep.subr.bf16.mxu0 0
        %687 = vmatpush1.bf16.msra.mxu0 0
        %688 = vmatprep.subr.bf16.mxu0 0
        %689 = vmatpush1.bf16.msra.mxu0 0
        %690 = vmatprep.subr.bf16.mxu0 0
        %691 = vmatpush1.bf16.msra.mxu0 0
        %692 = vmatprep.subr.bf16.mxu0 0
        %693 = vmatpush1.bf16.msra.mxu0 0
        %694 = vmatprep.subr.bf16.mxu0 0
        %695 = vmatpush1.bf16.msra.mxu0 %v277
        %696 = vmatprep.subr.bf16.mxu0 0
        %697 = vmatpush1.bf16.msra.mxu0 %v276
        %698 = vmatprep.subr.bf16.mxu0 0
        %699 = vmatpush2.bf16.msra.mxu0 0
        %700 = vmatprep.subr.bf16.mxu0 0
        %701 = vmatpush2.bf16.msra.mxu0 0
        %702 = vmatprep.subr.bf16.mxu0 0
        %703 = vmatpush2.bf16.msra.mxu0 0
        %704 = vmatprep.subr.bf16.mxu0 0
        %705 = vmatpush2.bf16.msra.mxu0 0
        %706 = vmatprep.subr.bf16.mxu0 0
        %707 = vmatpush2.bf16.msra.mxu0 0
        %708 = vmatprep.subr.bf16.mxu0 0
        %709 = vmatpush2.bf16.msra.mxu0 0
        %710 = vmatprep.subr.bf16.mxu0 0
        %711 = vmatpush2.bf16.msra.mxu0 0
        %712 = vmatprep.subr.bf16.mxu0 0
        %713 = vmatpush2.bf16.msra.mxu0 0
        %714 = vmatprep.mubr.bf16.mxu0 0
        %715 = vmatmul.mubr.bf16.gmra.mxu0 %v680
        %v716 = vpop.f32.mrf.mxu0
        %v717 = vadd.f32 0.0, %v716
        %v718 = vpop.f32.mrf.mxu0
        %v719 = vpop.f32.mrf.mxu0
        %v720 = vadd.f32 0.0, %v719
        %v721 = vpop.f32.mrf.mxu0
        %722 = vdwg.mxu0
        %v723 = vadd.f32 %v411, %v717
        %v724 = vadd.f32 %v414, %v720
        %v725 = vtanh.pop %v723
        %v726 = vtanh.pop %v724
        %v727 = vpack.c.bf16 %v726, %v725
        %v729 = vsel %vm433, %v727, 0
        %731 = vmatprep.subr.bf16.mxu0 0
        %732 = vmatpush1.bf16.msra.mxu0 0
        %733 = vmatprep.subr.bf16.mxu0 0
        %734 = vmatpush1.bf16.msra.mxu0 0
        %735 = vmatprep.subr.bf16.mxu0 0
        %736 = vmatpush1.bf16.msra.mxu0 0
        %737 = vmatprep.subr.bf16.mxu0 0
        %738 = vmatpush1.bf16.msra.mxu0 0
        %739 = vmatprep.subr.bf16.mxu0 0
        %740 = vmatpush1.bf16.msra.mxu0 0
        %741 = vmatprep.subr.bf16.mxu0 0
        %742 = vmatpush1.bf16.msra.mxu0 0
        %743 = vmatprep.subr.bf16.mxu0 0
        %744 = vmatpush1.bf16.msra.mxu0 %v277
        %745 = vmatprep.subr.bf16.mxu0 0
        %746 = vmatpush1.bf16.msra.mxu0 %v276
        %747 = vmatprep.subr.bf16.mxu0 0
        %748 = vmatpush2.bf16.msra.mxu0 0
        %749 = vmatprep.subr.bf16.mxu0 0
        %750 = vmatpush2.bf16.msra.mxu0 0
        %751 = vmatprep.subr.bf16.mxu0 0
        %752 = vmatpush2.bf16.msra.mxu0 0
        %753 = vmatprep.subr.bf16.mxu0 0
        %754 = vmatpush2.bf16.msra.mxu0 0
        %755 = vmatprep.subr.bf16.mxu0 0
        %756 = vmatpush2.bf16.msra.mxu0 0
        %757 = vmatprep.subr.bf16.mxu0 0
        %758 = vmatpush2.bf16.msra.mxu0 0
        %759 = vmatprep.subr.bf16.mxu0 0
        %760 = vmatpush2.bf16.msra.mxu0 0
        %761 = vmatprep.subr.bf16.mxu0 0
        %762 = vmatpush2.bf16.msra.mxu0 0
        %763 = vmatprep.mubr.bf16.mxu0 0
        %764 = vmatmul.mubr.bf16.gmra.mxu0 %v729
        %v765 = vpop.f32.mrf.mxu0
        %v766 = vadd.f32 0.0, %v765
        %v767 = vpop.f32.mrf.mxu0
        %v768 = vpop.f32.mrf.mxu0
        %v769 = vadd.f32 0.0, %v768
        %v770 = vpop.f32.mrf.mxu0
        %771 = vdwg.mxu0
        %v772 = vadd.f32 %v419, %v766
        %v773 = vadd.f32 %v422, %v769
        %v774 = vtanh.pop %v772
        %v775 = vtanh.pop %v773
        %v776 = vpack.c.bf16 %v775, %v774
        %v778 = vsel %vm433, %v776, 0
        %780 = vmatprep.subr.bf16.mxu0 0
        %781 = vmatpush1.bf16.msra.mxu0 0
        %782 = vmatprep.subr.bf16.mxu0 0
        %783 = vmatpush1.bf16.msra.mxu0 0
        %784 = vmatprep.subr.bf16.mxu0 0
        %785 = vmatpush1.bf16.msra.mxu0 0
        %786 = vmatprep.subr.bf16.mxu0 0
        %787 = vmatpush1.bf16.msra.mxu0 0
        %788 = vmatprep.subr.bf16.mxu0 0
        %789 = vmatpush1.bf16.msra.mxu0 0
        %790 = vmatprep.subr.bf16.mxu0 0
        %791 = vmatpush1.bf16.msra.mxu0 0
        %792 = vmatprep.subr.bf16.mxu0 0
        %793 = vmatpush1.bf16.msra.mxu0 %v277
        %794 = vmatprep.subr.bf16.mxu0 0
        %795 = vmatpush1.bf16.msra.mxu0 %v276
        %796 = vmatprep.subr.bf16.mxu0 0
        %797 = vmatpush2.bf16.msra.mxu0 0
        %798 = vmatprep.subr.bf16.mxu0 0
        %799 = vmatpush2.bf16.msra.mxu0 0
        %800 = vmatprep.subr.bf16.mxu0 0
        %801 = vmatpush2.bf16.msra.mxu0 0
        %802 = vmatprep.subr.bf16.mxu0 0
        %803 = vmatpush2.bf16.msra.mxu0 0
        %804 = vmatprep.subr.bf16.mxu0 0
        %805 = vmatpush2.bf16.msra.mxu0 0
        %806 = vmatprep.subr.bf16.mxu0 0
        %807 = vmatpush2.bf16.msra.mxu0 0
        %808 = vmatprep.subr.bf16.mxu0 0
        %809 = vmatpush2.bf16.msra.mxu0 0
        %810 = vmatprep.subr.bf16.mxu0 0
        %811 = vmatpush2.bf16.msra.mxu0 0
        %812 = vmatprep.mubr.bf16.mxu0 0
        %813 = vmatmul.mubr.bf16.gmra.mxu0 %v778
        %v814 = vpop.f32.mrf.mxu0
        %v815 = vadd.f32 0.0, %v814
        %v816 = vpop.f32.mrf.mxu0
        %v817 = vpop.f32.mrf.mxu0
        %v818 = vadd.f32 0.0, %v817
        %v819 = vpop.f32.mrf.mxu0
        %820 = vdwg.mxu0
        %v821 = vadd.f32 %v427, %v815
        %v822 = vadd.f32 %v430, %v818
        %v823 = vtanh.pop %v821
        %v824 = vtanh.pop %v822
        %v825 = vpack.c.bf16 %v824, %v823
        %v826 = vpack.c.bf16 %v272, %v271
        %v827 = vpack.c.bf16 %v274, %v273
        %v828 = vlaneseq
        %v829 = vshrl.u32 %v828, 7
        %v830 = vsub.s32 0, %v829
        %v831 = vrot.slane %v275, %v830
        %v833 = vsel %vm433, %v825, 0
        %835 = vmatprep.subr.bf16.mxu0 0
        %836 = vmatpush1.bf16.msra.mxu0 0
        %837 = vmatprep.subr.bf16.mxu0 0
        %838 = vmatpush1.bf16.msra.mxu0 0
        %839 = vmatprep.subr.bf16.mxu0 0
        %840 = vmatpush1.bf16.msra.mxu0 0
        %841 = vmatprep.subr.bf16.mxu0 0
        %842 = vmatpush1.bf16.msra.mxu0 0
        %843 = vmatprep.subr.bf16.mxu0 0
        %844 = vmatpush1.bf16.msra.mxu0 0
        %845 = vmatprep.subr.bf16.mxu0 0
        %846 = vmatpush1.bf16.msra.mxu0 0
        %847 = vmatprep.subr.bf16.mxu0 0
        %848 = vmatpush1.bf16.msra.mxu0 %v827
        %849 = vmatprep.subr.bf16.mxu0 0
        %850 = vmatpush1.bf16.msra.mxu0 %v826
        %851 = vmatprep.subr.bf16.mxu0 0
        %852 = vmatpush2.bf16.msra.mxu0 0
        %853 = vmatprep.subr.bf16.mxu0 0
        %854 = vmatpush2.bf16.msra.mxu0 0
        %855 = vmatprep.subr.bf16.mxu0 0
        %856 = vmatpush2.bf16.msra.mxu0 0
        %857 = vmatprep.subr.bf16.mxu0 0
        %858 = vmatpush2.bf16.msra.mxu0 0
        %859 = vmatprep.subr.bf16.mxu0 0
        %860 = vmatpush2.bf16.msra.mxu0 0
        %861 = vmatprep.subr.bf16.mxu0 0
        %862 = vmatpush2.bf16.msra.mxu0 0
        %863 = vmatprep.subr.bf16.mxu0 0
        %864 = vmatpush2.bf16.msra.mxu0 0
        %865 = vmatprep.subr.bf16.mxu0 0
        %866 = vmatpush2.bf16.msra.mxu0 0
        %867 = vmatprep.mubr.bf16.mxu0 0
        %868 = vmatmul.mubr.bf16.gmra.mxu0 %v484
        %v869 = vpop.f32.mrf.mxu0
        %v870 = vadd.f32 %v831, %v869
        %v871 = vpop.f32.mrf.mxu0
        %v872 = vpop.f32.mrf.mxu0
        %v873 = vadd.f32 %v831, %v872
        %v874 = vpop.f32.mrf.mxu0
        %875 = vmatprep.mubr.bf16.mxu0 0
        %876 = vmatmul.mubr.bf16.gmra.mxu0 %v533
        %v877 = vpop.f32.mrf.mxu0
        %v878 = vadd.f32 %v831, %v877
        %v879 = vpop.f32.mrf.mxu0
        %v880 = vpop.f32.mrf.mxu0
        %v881 = vadd.f32 %v831, %v880
        %v882 = vpop.f32.mrf.mxu0
        %883 = vmatprep.mubr.bf16.mxu0 0
        %884 = vmatmul.mubr.bf16.gmra.mxu0 %v582
        %v885 = vpop.f32.mrf.mxu0
        %v886 = vadd.f32 %v831, %v885
        %v887 = vpop.f32.mrf.mxu0
        %v888 = vpop.f32.mrf.mxu0
        %v889 = vadd.f32 %v831, %v888
        %v890 = vpop.f32.mrf.mxu0
        %891 = vmatprep.mubr.bf16.mxu0 0
        %892 = vmatmul.mubr.bf16.gmra.mxu0 %v631
        %v893 = vpop.f32.mrf.mxu0
        %v894 = vadd.f32 %v831, %v893
        %v895 = vpop.f32.mrf.mxu0
        %v896 = vpop.f32.mrf.mxu0
        %v897 = vadd.f32 %v831, %v896
        %v898 = vpop.f32.mrf.mxu0
        %899 = vmatprep.mubr.bf16.mxu0 0
        %900 = vmatmul.mubr.bf16.gmra.mxu0 %v680
        %v901 = vpop.f32.mrf.mxu0
        %v902 = vadd.f32 %v831, %v901
        %v903 = vpop.f32.mrf.mxu0
        %v904 = vpop.f32.mrf.mxu0
        %v905 = vadd.f32 %v831, %v904
        %v906 = vpop.f32.mrf.mxu0
        %907 = vmatprep.mubr.bf16.mxu0 0
        %908 = vmatmul.mubr.bf16.gmra.mxu0 %v729
        %v909 = vpop.f32.mrf.mxu0
        %v910 = vadd.f32 %v831, %v909
        %v911 = vpop.f32.mrf.mxu0
        %v912 = vpop.f32.mrf.mxu0
        %v913 = vadd.f32 %v831, %v912
        %v914 = vpop.f32.mrf.mxu0
        %915 = vmatprep.mubr.bf16.mxu0 0
        %916 = vmatmul.mubr.bf16.gmra.mxu0 %v778
        %v917 = vpop.f32.mrf.mxu0
        %v918 = vadd.f32 %v831, %v917
        %v919 = vpop.f32.mrf.mxu0
        %v920 = vpop.f32.mrf.mxu0
        %v921 = vadd.f32 %v831, %v920
        %v922 = vpop.f32.mrf.mxu0
        %923 = vmatprep.mubr.bf16.mxu0 0
        %924 = vmatmul.mubr.bf16.gmra.mxu0 %v833
        %v925 = vpop.f32.mrf.mxu0
        %v926 = vadd.f32 %v831, %v925
        %v927 = vpop.f32.mrf.mxu0
        %v928 = vpop.f32.mrf.mxu0
        %v929 = vadd.f32 %v831, %v928
        %v930 = vpop.f32.mrf.mxu0
        %931 = vdwg.mxu0
        %vm932 = vcmask 72704
        %933 = vst.msk [vmem:[%s260] sm:$0xff] %vm932, %v870
        %934 = vst.msk [vmem:[%s260 + $0x8] sm:$0xff] %vm932, %v873
        %935 = vst.msk [vmem:[%s260 + $0x10] sm:$0xff] %vm932, %v878
        %936 = vst.msk [vmem:[%s260 + $0x18] sm:$0xff] %vm932, %v881
        %937 = vst.msk [vmem:[%s260 + $0x20] sm:$0xff] %vm932, %v886
        %938 = vst.msk [vmem:[%s260 + $0x28] sm:$0xff] %vm932, %v889
        %939 = vst.msk [vmem:[%s260 + $0x30] sm:$0xff] %vm932, %v894
        %940 = vst.msk [vmem:[%s260 + $0x38] sm:$0xff] %vm932, %v897
        %941 = vst.msk [vmem:[%s260 + $0x40] sm:$0xff] %vm932, %v902
        %942 = vst.msk [vmem:[%s260 + $0x48] sm:$0xff] %vm932, %v905
        %943 = vst.msk [vmem:[%s260 + $0x50] sm:$0xff] %vm932, %v910
        %944 = vst.msk [vmem:[%s260 + $0x58] sm:$0xff] %vm932, %v913
        %945 = vst.msk [vmem:[%s260 + $0x60] sm:$0xff] %vm932, %v918
        %946 = vst.msk [vmem:[%s260 + $0x68] sm:$0xff] %vm932, %v921
        %947 = vst.msk [vmem:[%s260 + $0x70] sm:$0xff] %vm932, %v926
        %948 = vst.msk [vmem:[%s260 + $0x78] sm:$0xff] %vm932, %v929
        %s949 = sand.u32 %s90, 1
        %s950 = sand.u32 %s90, 1
        %s951 = smul.addr %s950, 128
        %s952 = scalar_lea.vmem [#allocation3], %s951
        // Predicated region
        $region71: #{tpu_custom_call.1} parent=65 // pred_check
          %p953 = pneg %p100
        $region72: #{tpu_custom_call.1} parent=65 // pred_check_branch
          %955 = sbr.rel (%p953) target = $region74
        $region73: #{tpu_custom_call.1} parent=65 // pred_region
          %s956 = smul.u32 2, %s14
          %s957 = smul.addr %s956, 8
          %s958 = scalar_lea.vmem %s3, %s957
          // Predicated region
          $region75: #{tpu_custom_call.1} parent=73 // pred_check
            _
          $region76: #{tpu_custom_call.1} parent=73 // pred_check_branch
            %960 = sbr.rel (0) target = $region78
          $region77: #{tpu_custom_call.1} parent=73 // pred_region
            // Predicated region
            $region79: #{tpu_custom_call.1} parent=77 // pred_check
              _
            $region80: #{tpu_custom_call.1} parent=77 // pred_check_branch
              %962 = sbr.rel (0) target = $region82
            $region81: #{tpu_custom_call.1} parent=77 // pred_region
              // Predicated region
              $region94: #{tpu_custom_call.1} parent=81 // pred_check
                _
              $region95: #{tpu_custom_call.1} parent=81 // pred_check_branch
                %1008 = sbr.rel (0) target = $region97
              $region96: #{tpu_custom_call.1} parent=81 // pred_region
                loop: start=0, step=1, limit=1
                $region98: #{tpu_custom_call.1} parent=96 // loop_pre_header
                  _
                $region99: #{tpu_custom_call.1} parent=96 // loop_header
                  %s1010 = sphi 0, %s1014
                  %p1011 = scmp.ge.s32.totalorder %s1010, 1
                  %s1015 = sphi %s952, %s952
                  %s1016 = sphi %s958, %s958
                $region100: #{tpu_custom_call.1} parent=96 // loop_header_branch
                  %1013 = sbr.rel (%p1011) target = $region104
                $region101: #{tpu_custom_call.1} parent=96 // loop_body
                  %v1017 = vld [vmem:[%s1015] sm:$0xff]
                  %1018 = vst [vmem:[%s1016] sm:$0xff] %v1017
                  %v1019 = vld [vmem:[%s1015 + $0x8] sm:$0xff]
                  %1020 = vst [vmem:[%s1016 + $0x8] sm:$0xff] %v1019
                  %v1021 = vld [vmem:[%s1015 + $0x10] sm:$0xff]
                  %1022 = vst [vmem:[%s1016 + $0x20] sm:$0xff] %v1021
                  %v1023 = vld [vmem:[%s1015 + $0x18] sm:$0xff]
                  %1024 = vst [vmem:[%s1016 + $0x28] sm:$0xff] %v1023
                  %v1025 = vld [vmem:[%s1015 + $0x20] sm:$0xff]
                  %1026 = vst [vmem:[%s1016 + $0x40] sm:$0xff] %v1025
                  %v1027 = vld [vmem:[%s1015 + $0x28] sm:$0xff]
                  %1028 = vst [vmem:[%s1016 + $0x48] sm:$0xff] %v1027
                  %v1029 = vld [vmem:[%s1015 + $0x30] sm:$0xff]
                  %1030 = vst [vmem:[%s1016 + $0x60] sm:$0xff] %v1029
                  %v1031 = vld [vmem:[%s1015 + $0x38] sm:$0xff]
                  %1032 = vst [vmem:[%s1016 + $0x68] sm:$0xff] %v1031
                  %v1033 = vld [vmem:[%s1015 + $0x40] sm:$0xff]
                  %1034 = vst [vmem:[%s1016 + $0x80] sm:$0xff] %v1033
                  %v1035 = vld [vmem:[%s1015 + $0x48] sm:$0xff]
                  %1036 = vst [vmem:[%s1016 + $0x88] sm:$0xff] %v1035
                  %v1037 = vld [vmem:[%s1015 + $0x50] sm:$0xff]
                  %1038 = vst [vmem:[%s1016 + $0xa0] sm:$0xff] %v1037
                  %v1039 = vld [vmem:[%s1015 + $0x58] sm:$0xff]
                  %1040 = vst [vmem:[%s1016 + $0xa8] sm:$0xff] %v1039
                  %v1041 = vld [vmem:[%s1015 + $0x60] sm:$0xff]
                  %1042 = vst [vmem:[%s1016 + $0xc0] sm:$0xff] %v1041
                  %v1043 = vld [vmem:[%s1015 + $0x68] sm:$0xff]
                  %1044 = vst [vmem:[%s1016 + $0xc8] sm:$0xff] %v1043
                  %v1045 = vld [vmem:[%s1015 + $0x70] sm:$0xff]
                  %1046 = vst [vmem:[%s1016 + $0xe0] sm:$0xff] %v1045
                  %v1047 = vld [vmem:[%s1015 + $0x78] sm:$0xff]
                  %1048 = vst [vmem:[%s1016 + $0xe8] sm:$0xff] %v1047
                $region102: #{tpu_custom_call.1} parent=96 // loop_footer
                  %s1014 = sadd.s32 1, %s1010
                $region103: #{tpu_custom_call.1} parent=96 // loop_footer_branch
                  %1009 = sbr.rel target = $region99
                $region104: #{tpu_custom_call.1} parent=96 // loop_exit
                  _
              $region97: #{tpu_custom_call.1} parent=81 // pred_fallthru
                _
              // Predicated region
              $region105: #{tpu_custom_call.1} parent=81 // pred_check
                _
              $region106: #{tpu_custom_call.1} parent=81 // pred_check_branch
                %1050 = sbr.rel target = $region108
              $region107: #{tpu_custom_call.1} parent=81 // pred_region
                _
              $region108: #{tpu_custom_call.1} parent=81 // pred_fallthru
                _
            $region82: #{tpu_custom_call.1} parent=77 // pred_fallthru
              _
            // Predicated region
            $region83: #{tpu_custom_call.1} parent=77 // pred_check
              _
            $region84: #{tpu_custom_call.1} parent=77 // pred_check_branch
              %964 = sbr.rel target = $region86
            $region85: #{tpu_custom_call.1} parent=77 // pred_region
              %s966 = ssub.s32 256, 1
              loop: start=0, step=1, limit=1
              $region87: #{tpu_custom_call.1} parent=85 // loop_pre_header
                _
              $region88: #{tpu_custom_call.1} parent=85 // loop_header
                %s968 = sphi 0, %s972
                %p969 = scmp.ge.s32.totalorder %s968, 1
                %s973 = sphi %s952, %s952
                %s974 = sphi %s958, %s958
              $region89: #{tpu_custom_call.1} parent=85 // loop_header_branch
                %971 = sbr.rel (%p969) target = $region93
              $region90: #{tpu_custom_call.1} parent=85 // loop_body
                %v975 = vld [vmem:[%s973] sm:%s966]
                %976 = vst [vmem:[%s974] sm:%s966] %v975
                %v977 = vld [vmem:[%s973 + $0x8] sm:%s966]
                %978 = vst [vmem:[%s974 + $0x8] sm:%s966] %v977
                %v979 = vld [vmem:[%s973 + $0x10] sm:%s966]
                %980 = vst [vmem:[%s974 + $0x20] sm:%s966] %v979
                %v981 = vld [vmem:[%s973 + $0x18] sm:%s966]
                %982 = vst [vmem:[%s974 + $0x28] sm:%s966] %v981
                %v983 = vld [vmem:[%s973 + $0x20] sm:%s966]
                %984 = vst [vmem:[%s974 + $0x40] sm:%s966] %v983
                %v985 = vld [vmem:[%s973 + $0x28] sm:%s966]
                %986 = vst [vmem:[%s974 + $0x48] sm:%s966] %v985
                %v987 = vld [vmem:[%s973 + $0x30] sm:%s966]
                %988 = vst [vmem:[%s974 + $0x60] sm:%s966] %v987
                %v989 = vld [vmem:[%s973 + $0x38] sm:%s966]
                %990 = vst [vmem:[%s974 + $0x68] sm:%s966] %v989
                %v991 = vld [vmem:[%s973 + $0x40] sm:%s966]
                %992 = vst [vmem:[%s974 + $0x80] sm:%s966] %v991
                %v993 = vld [vmem:[%s973 + $0x48] sm:%s966]
                %994 = vst [vmem:[%s974 + $0x88] sm:%s966] %v993
                %v995 = vld [vmem:[%s973 + $0x50] sm:%s966]
                %996 = vst [vmem:[%s974 + $0xa0] sm:%s966] %v995
                %v997 = vld [vmem:[%s973 + $0x58] sm:%s966]
                %998 = vst [vmem:[%s974 + $0xa8] sm:%s966] %v997
                %v999 = vld [vmem:[%s973 + $0x60] sm:%s966]
                %1000 = vst [vmem:[%s974 + $0xc0] sm:%s966] %v999
                %v1001 = vld [vmem:[%s973 + $0x68] sm:%s966]
                %1002 = vst [vmem:[%s974 + $0xc8] sm:%s966] %v1001
                %v1003 = vld [vmem:[%s973 + $0x70] sm:%s966]
                %1004 = vst [vmem:[%s974 + $0xe0] sm:%s966] %v1003
                %v1005 = vld [vmem:[%s973 + $0x78] sm:%s966]
                %1006 = vst [vmem:[%s974 + $0xe8] sm:%s966] %v1005
              $region91: #{tpu_custom_call.1} parent=85 // loop_footer
                %s972 = sadd.s32 1, %s968
              $region92: #{tpu_custom_call.1} parent=85 // loop_footer_branch
                %967 = sbr.rel target = $region88
              $region93: #{tpu_custom_call.1} parent=85 // loop_exit
                _
            $region86: #{tpu_custom_call.1} parent=77 // pred_fallthru
              _
          $region78: #{tpu_custom_call.1} parent=73 // pred_fallthru
            _
          %1051 = vnop
        $region74: #{tpu_custom_call.1} parent=65 // pred_fallthru
          _
      $region66: #{tpu_custom_call.1} parent=5 // pred_fallthru
        _
      %p1052 = scmp.le.s32.totalorder 2, %s9
      // Predicated region
      $region109: #{tpu_custom_call.1} parent=5 // pred_check
        %p1053 = pneg %p1052
      $region110: #{tpu_custom_call.1} parent=5 // pred_check_branch
        %1055 = sbr.rel (%p1053) target = $region112
      $region111: #{tpu_custom_call.1} parent=5 // pred_region
        %s1056 = ssub.s32 %s9, 2
        // Predicated region
        $region113: #{tpu_custom_call.1} parent=111 // pred_check
          %p1057 = pneg %p106
        $region114: #{tpu_custom_call.1} parent=111 // pred_check_branch
          %1059 = sbr.rel (%p1057) target = $region116
        $region115: #{tpu_custom_call.1} parent=111 // pred_region
          %s1060 = sand.u32 %s91, 1
          %s1061 = sand.u32 %s91, 1
          %s1062 = smul.addr %s1061, 128
          %s1063 = scalar_lea.vmem [#allocation3], %s1062
        $region116: #{tpu_custom_call.1} parent=111 // pred_fallthru
          _
      $region112: #{tpu_custom_call.1} parent=5 // pred_fallthru
        _
    $region6: #{tpu_custom_call.1} parent=1 // loop_footer
      %s13 = sadd.s32 1, %s9
    $region7: #{tpu_custom_call.1} parent=1 // loop_footer_branch
      %8 = sbr.rel target = $region3
    $region8: #{tpu_custom_call.1} parent=1 // loop_exit
      _

</llo_original>
